<compile_context>
chip_gen: v7x
topology: tpu7x:2x2x1
jax: 0.10.0
libtpu: 0.0.40
codegen_flags: <defaults>
</compile_context>

<pallas_src>
import jax
import jax.numpy as jnp
from jax.experimental import pallas as pl
from jax.experimental.pallas import tpu as pltpu


def basic_block_kernel(x_ref, b1_ref, bias1_ref, b2_ref, bias2_ref, o_ref):
    # x_ref:   (1, H, W*C)      one batch element, channels innermost
    # b*_ref:  (3*W*C, W*C)     block-banded conv+BN weights (3 row-taps stacked)
    # bias*:   (1, W*C)         folded BN bias, tiled over x
    # o_ref:   (1, H, W*C)
    H, WC = o_ref.shape[1], o_ref.shape[2]
    x = x_ref[0].astype(jnp.float32)                       # (H, W*C), lane-dense
    rows = jax.lax.broadcasted_iota(jnp.int32, (H, WC), 0)

    def row_shift(v, dy):
        # v[y + dy, :] with zero fill at the top/bottom image boundary.
        r = pltpu.roll(v, (-dy) % H, axis=0)               # XLU sublane rotate
        edge = H - 1 if dy > 0 else 0
        return jnp.where(rows == edge, 0.0, r)             # VPU masked select

    def conv_bn(v, b_ref, bias_ref):
        # 3x3 conv + folded BN as ONE fused matmul: (H, 3*W*C) @ (3*W*C, W*C).
        # x-direction taps / padding live in the banded weight matrix; the
        # y-direction taps come from the three stacked row shifts.
        a = jnp.concatenate([row_shift(v, -1), v, row_shift(v, 1)], axis=1)
        # NOTE: casting `a` / weights to bf16 (keeping f32 accumulation) is a
        # further v6e/v7x win; kept in f32 here to match module semantics.
        return jnp.dot(a, b_ref[...], preferred_element_type=jnp.float32) + bias_ref[...]

    out1 = jnp.maximum(conv_bn(x, b1_ref, bias1_ref), 0.0)       # conv1 + bn1 + ReLU
    out2 = conv_bn(out1, b2_ref, bias2_ref)                      # conv2 + bn2
    o_ref[0] = jnp.maximum(out2 + x, 0.0).astype(o_ref.dtype)    # + residual, ReLU


def basic_block(x_nhwc, w1, g1, be1, m1, v1, w2, g2, be2, m2, v2, eps=1e-5):
    """x_nhwc: (N, H, W, C); w*: (Cout, Cin, 3, 3); g/be/m/v: (C,) BN params."""
    N, H, W, C = x_nhwc.shape
    WC = W * C                      # lane axis of the kernel; 128 at NanoDet toy shape

    def fold_bn(g, b, m, v):        # inference-mode BN fold
        s = g / jnp.sqrt(v + eps)
        return s, b - m * s

    def make_banded(w, s):
        # Build B with B[d*W*C + (x+dx)*C + ci, x*C + co] = w[co,ci,d,dx+1]*s[co]
        # for dx in {-1,0,1} and 0 <= x+dx < W (x-boundary zeros are implicit).
        taps = jnp.transpose(w * s[:, None, None, None], (2, 3, 1, 0))  # (ky,kx,ci,co)
        blocks = []
        for d in range(3):
            Bd = jnp.zeros((W * C, W * C), jnp.float32)
            for kx in range(3):
                dx = kx - 1
                band = jnp.eye(W, k=-dx, dtype=jnp.float32)   # 1 iff row = col + dx
                Bd = Bd + jnp.kron(band, taps[d, kx])
            blocks.append(Bd)
        return jnp.concatenate(blocks, axis=0)                # (3*W*C, W*C)

    s1, bias1 = fold_bn(g1, be1, m1, v1)
    s2, bias2 = fold_bn(g2, be2, m2, v2)
    B1 = make_banded(w1, s1)
    B2 = make_banded(w2, s2)
    bias1_m = jnp.tile(bias1, W).reshape(1, WC)
    bias2_m = jnp.tile(bias2, W).reshape(1, WC)

    x2d = x_nhwc.reshape(N, H, WC)                            # channels innermost

    out2d = pl.pallas_call(
        basic_block_kernel,
        out_shape=jax.ShapeDtypeStruct((N, H, WC), x_nhwc.dtype),
        grid_spec=pltpu.PrefetchScalarGridSpec(
            num_scalar_prefetch=0,
            grid=(N,),
            in_specs=[
                pl.BlockSpec((1, H, WC), lambda n: (n, 0, 0)),
                pl.BlockSpec((3 * WC, WC), lambda n: (0, 0)),
                pl.BlockSpec((1, WC), lambda n: (0, 0)),
                pl.BlockSpec((3 * WC, WC), lambda n: (0, 0)),
                pl.BlockSpec((1, WC), lambda n: (0, 0)),
            ],
            out_specs=pl.BlockSpec((1, H, WC), lambda n: (n, 0, 0)),
        ),
        compiler_params=pltpu.CompilerParams(dimension_semantics=("parallel",)),
    )(x2d, B1, bias1_m, B2, bias2_m)
    return out2d.reshape(N, H, W, C)


def ref_basic_block(x_nhwc, w1, g1, be1, m1, v1, w2, g2, be2, m2, v2, eps=1e-5):
    def conv(x, w):  # w: (Cout, Cin, 3, 3)
        w_hwio = jnp.transpose(w, (2, 3, 1, 0))
        return jax.lax.conv_general_dilated(
            x, w_hwio, (1, 1), "SAME",
            dimension_numbers=("NHWC", "HWIO", "NHWC"))

    def bn(x, g, b, m, v):
        return (x - m) / jnp.sqrt(v + eps) * g + b

    out = jax.nn.relu(bn(conv(x_nhwc, w1), g1, be1, m1, v1))
    out = bn(conv(out, w2), g2, be2, m2, v2)
    return jax.nn.relu(out + x_nhwc)


if __name__ == "__main__":
    # BasicBlock(inplanes=8, planes=8, stride=1, downsample=None, activation='ReLU')
    N, C, H, W = 2, 8, 16, 16          # W * C = 128 -> fully lane-dense layout
    ks = jax.random.split(jax.random.PRNGKey(0), 11)
    x_nchw = jax.random.normal(ks[0], (N, C, H, W), jnp.float32)   # PyTorch NCHW input
    w1 = 0.1 * jax.random.normal(ks[1], (C, C, 3, 3), jnp.float32)
    w2 = 0.1 * jax.random.normal(ks[2], (C, C, 3, 3), jnp.float32)
    g1 = 1.0 + 0.1 * jax.random.normal(ks[3], (C,), jnp.float32)
    be1 = 0.1 * jax.random.normal(ks[4], (C,), jnp.float32)
    m1 = 0.1 * jax.random.normal(ks[5], (C,), jnp.float32)
    v1 = jnp.abs(jax.random.normal(ks[6], (C,), jnp.float32)) + 0.5
    g2 = 1.0 + 0.1 * jax.random.normal(ks[7], (C,), jnp.float32)
    be2 = 0.1 * jax.random.normal(ks[8], (C,), jnp.float32)
    m2 = 0.1 * jax.random.normal(ks[9], (C,), jnp.float32)
    v2 = jnp.abs(jax.random.normal(ks[10], (C,), jnp.float32)) + 0.5

    x_nhwc = jnp.transpose(x_nchw, (0, 2, 3, 1))    # layout glue (NCHW -> NHWC)
    out = basic_block(x_nhwc, w1, g1, be1, m1, v1, w2, g2, be2, m2, v2)
    out = jax.block_until_ready(out)

    ref = ref_basic_block(x_nhwc, w1, g1, be1, m1, v1, w2, g2, be2, m2, v2)
    err = float(jnp.max(jnp.abs(out - ref)))
    assert jnp.allclose(out, ref, atol=1e-3, rtol=1e-3), f"max abs err {err}"

    _ = jnp.transpose(out, (0, 3, 1, 2))            # back to PyTorch NCHW convention
    print("KERNEL_OK")
</pallas_src>

<mosaic_0001>
module attributes {stable_mosaic.version = 11 : i64} {
  func.func @basic_block_kernel(%arg0: i32, %arg1: memref<1x16x128xf32, #tpu.memory_space<vmem>>, %arg2: memref<384x128xf32, #tpu.memory_space<vmem>>, %arg3: memref<1x128xf32, #tpu.memory_space<vmem>>, %arg4: memref<384x128xf32, #tpu.memory_space<vmem>>, %arg5: memref<1x128xf32, #tpu.memory_space<vmem>>, %arg6: memref<1x16x128xf32, #tpu.memory_space<vmem>>) attributes {dimension_semantics = [#tpu.dimension_semantics<parallel>], iteration_bounds = array<i64: 2>, scalar_prefetch = 0 : i64, scratch_operands = 0 : i64, tpu.core_type = #tpu.core_type<tc>, window_params = [{transform_indices = @transform_0, window_bounds = array<i64: 1, 16, 128>}, {pipeline_mode = #tpu.pipeline_mode<synchronous>, transform_indices = @transform_1, window_bounds = array<i64: 384, 128>}, {pipeline_mode = #tpu.pipeline_mode<synchronous>, transform_indices = @transform_2, window_bounds = array<i64: 1, 128>}, {pipeline_mode = #tpu.pipeline_mode<synchronous>, transform_indices = @transform_3, window_bounds = array<i64: 384, 128>}, {pipeline_mode = #tpu.pipeline_mode<synchronous>, transform_indices = @transform_4, window_bounds = array<i64: 1, 128>}, {transform_indices = @transform_5, window_bounds = array<i64: 1, 16, 128>}]} {
    %c0 = arith.constant 0 : index
    %c0_0 = arith.constant 0 : index
    %c0_1 = arith.constant 0 : index
    %0 = vector.load %arg1[%c0, %c0_0, %c0_1] : memref<1x16x128xf32, #tpu.memory_space<vmem>>, vector<1x16x128xf32>
    %1 = vector.shape_cast %0 : vector<1x16x128xf32> to vector<16x128xf32>
    %2 = tpu.iota {dimensions = array<i32: 0>} : vector<16x128xi32>
    %c1_i32 = arith.constant 1 : i32
    %3 = tpu.dynamic_rotate %1 by %c1_i32 dim 0 : vector<16x128xf32>, i32 -> vector<16x128xf32>
    %c0_i32 = arith.constant 0 : i32
    %4 = vector.broadcast %c0_i32 : i32 to vector<16x128xi32>
    %5 = arith.cmpi eq, %2, %4 : vector<16x128xi32>
    %cst = arith.constant 0.000000e+00 : f32
    %6 = vector.broadcast %cst : f32 to vector<16x128xf32>
    %7 = arith.select %5, %6, %3 : vector<16x128xi1>, vector<16x128xf32>
    %c15_i32 = arith.constant 15 : i32
    %8 = tpu.dynamic_rotate %1 by %c15_i32 dim 0 : vector<16x128xf32>, i32 -> vector<16x128xf32>
    %c15_i32_2 = arith.constant 15 : i32
    %9 = vector.broadcast %c15_i32_2 : i32 to vector<16x128xi32>
    %10 = arith.cmpi eq, %2, %9 : vector<16x128xi32>
    %cst_3 = arith.constant 0.000000e+00 : f32
    %11 = vector.broadcast %cst_3 : f32 to vector<16x128xf32>
    %12 = arith.select %10, %11, %8 : vector<16x128xi1>, vector<16x128xf32>
    %13 = tpu.concatenate %7, %1, %12 in 1 : vector<16x128xf32>, vector<16x128xf32>, vector<16x128xf32> -> vector<16x384xf32>
    %c0_4 = arith.constant 0 : index
    %c0_5 = arith.constant 0 : index
    %14 = vector.load %arg2[%c0_4, %c0_5] : memref<384x128xf32, #tpu.memory_space<vmem>>, vector<384x128xf32>
    %cst_6 = arith.constant dense<0.000000e+00> : vector<16x128xf32>
    %15 = tpu.matmul %13, %14, %cst_6 {dimension_numbers = #tpu.dot_dimension_numbers<[1], [0], [0], [1], [0, 0, 1, 1], [], []>} : vector<16x384xf32>, vector<384x128xf32>, vector<16x128xf32> -> vector<16x128xf32>
    %c0_7 = arith.constant 0 : index
    %c0_8 = arith.constant 0 : index
    %16 = vector.load %arg3[%c0_7, %c0_8] : memref<1x128xf32, #tpu.memory_space<vmem>>, vector<1x128xf32>
    %17 = vector.broadcast %16 : vector<1x128xf32> to vector<16x128xf32>
    %18 = arith.addf %15, %17 : vector<16x128xf32>
    %cst_9 = arith.constant 0.000000e+00 : f32
    %19 = vector.broadcast %cst_9 : f32 to vector<16x128xf32>
    %20 = arith.maximumf %18, %19 : vector<16x128xf32>
    %c1_i32_10 = arith.constant 1 : i32
    %21 = tpu.dynamic_rotate %20 by %c1_i32_10 dim 0 : vector<16x128xf32>, i32 -> vector<16x128xf32>
    %c0_i32_11 = arith.constant 0 : i32
    %22 = vector.broadcast %c0_i32_11 : i32 to vector<16x128xi32>
    %23 = arith.cmpi eq, %2, %22 : vector<16x128xi32>
    %cst_12 = arith.constant 0.000000e+00 : f32
    %24 = vector.broadcast %cst_12 : f32 to vector<16x128xf32>
    %25 = arith.select %23, %24, %21 : vector<16x128xi1>, vector<16x128xf32>
    %c15_i32_13 = arith.constant 15 : i32
    %26 = tpu.dynamic_rotate %20 by %c15_i32_13 dim 0 : vector<16x128xf32>, i32 -> vector<16x128xf32>
    %c15_i32_14 = arith.constant 15 : i32
    %27 = vector.broadcast %c15_i32_14 : i32 to vector<16x128xi32>
    %28 = arith.cmpi eq, %2, %27 : vector<16x128xi32>
    %cst_15 = arith.constant 0.000000e+00 : f32
    %29 = vector.broadcast %cst_15 : f32 to vector<16x128xf32>
    %30 = arith.select %28, %29, %26 : vector<16x128xi1>, vector<16x128xf32>
    %31 = tpu.concatenate %25, %20, %30 in 1 : vector<16x128xf32>, vector<16x128xf32>, vector<16x128xf32> -> vector<16x384xf32>
    %c0_16 = arith.constant 0 : index
    %c0_17 = arith.constant 0 : index
    %32 = vector.load %arg4[%c0_16, %c0_17] : memref<384x128xf32, #tpu.memory_space<vmem>>, vector<384x128xf32>
    %cst_18 = arith.constant dense<0.000000e+00> : vector<16x128xf32>
    %33 = tpu.matmul %31, %32, %cst_18 {dimension_numbers = #tpu.dot_dimension_numbers<[1], [0], [0], [1], [0, 0, 1, 1], [], []>} : vector<16x384xf32>, vector<384x128xf32>, vector<16x128xf32> -> vector<16x128xf32>
    %c0_19 = arith.constant 0 : index
    %c0_20 = arith.constant 0 : index
    %34 = vector.load %arg5[%c0_19, %c0_20] : memref<1x128xf32, #tpu.memory_space<vmem>>, vector<1x128xf32>
    %35 = vector.broadcast %34 : vector<1x128xf32> to vector<16x128xf32>
    %36 = arith.addf %33, %35 : vector<16x128xf32>
    %37 = arith.addf %36, %1 : vector<16x128xf32>
    %cst_21 = arith.constant 0.000000e+00 : f32
    %38 = vector.broadcast %cst_21 : f32 to vector<16x128xf32>
    %39 = arith.maximumf %37, %38 : vector<16x128xf32>
    %c0_22 = arith.constant 0 : index
    %c0_23 = arith.constant 0 : index
    %c0_24 = arith.constant 0 : index
    %40 = vector.load %arg6[%c0_22, %c0_23, %c0_24] : memref<1x16x128xf32, #tpu.memory_space<vmem>>, vector<1x16x128xf32>
    %41 = vector.shape_cast %40 : vector<1x16x128xf32> to vector<16x128xf32>
    %42 = vector.shape_cast %39 : vector<16x128xf32> to vector<1x16x128xf32>
    tpu.vector_store %arg6[%c0_22, %c0_23, %c0_24], %42 {strides = array<i32>} : memref<1x16x128xf32, #tpu.memory_space<vmem>>, vector<1x16x128xf32>,
    return
  }
  func.func @transform_0(%arg0: i32) -> (i32, i32, i32) {
    %c0_i32 = arith.constant 0 : i32
    %c0_i32_0 = arith.constant 0 : i32
    %c0_i32_1 = arith.constant 0 : i32
    return %arg0, %c0_i32, %c0_i32_0 : i32, i32, i32
  }
  func.func @transform_1(%arg0: i32) -> (i32, i32) {
    %c0_i32 = arith.constant 0 : i32
    %c0_i32_0 = arith.constant 0 : i32
    %c0_i32_1 = arith.constant 0 : i32
    return %c0_i32, %c0_i32_0 : i32, i32
  }
  func.func @transform_2(%arg0: i32) -> (i32, i32) {
    %c0_i32 = arith.constant 0 : i32
    %c0_i32_0 = arith.constant 0 : i32
    %c0_i32_1 = arith.constant 0 : i32
    return %c0_i32, %c0_i32_0 : i32, i32
  }
  func.func @transform_3(%arg0: i32) -> (i32, i32) {
    %c0_i32 = arith.constant 0 : i32
    %c0_i32_0 = arith.constant 0 : i32
    %c0_i32_1 = arith.constant 0 : i32
    return %c0_i32, %c0_i32_0 : i32, i32
  }
  func.func @transform_4(%arg0: i32) -> (i32, i32) {
    %c0_i32 = arith.constant 0 : i32
    %c0_i32_0 = arith.constant 0 : i32
    %c0_i32_1 = arith.constant 0 : i32
    return %c0_i32, %c0_i32_0 : i32, i32
  }
  func.func @transform_5(%arg0: i32) -> (i32, i32, i32) {
    %c0_i32 = arith.constant 0 : i32
    %c0_i32_0 = arith.constant 0 : i32
    %c0_i32_1 = arith.constant 0 : i32
    return %arg0, %c0_i32, %c0_i32_0 : i32, i32, i32
  }
}

</mosaic_0001>

<llo_original>
// kernel: tpu_custom_call.1
$region0: #{tpu_custom_call.1}
  #allocation0 [shape = 'u32[]', space=smem, size = 0x4, offset = 0x4, fixed_abs, tag = 'smem constant byte address 0x4 - core index']
  #allocation1 [shape = 'u32[144,128]{1,0:T(1,128)}', space=vmem, size = 0x12000, scoped, tag = 'internal scratch']
  %s0 = inlined_call_operand.hbm [shape: f32[2,16,128], index: 0, kind: input, shape index: {}]
  %s1 = inlined_call_operand.hbm [shape: f32[384,128], index: 1, kind: input, shape index: {}]
  %s2 = inlined_call_operand.vmem [shape: f32[1,128], index: 2, kind: input, shape index: {}]
  %s3 = inlined_call_operand.hbm [shape: f32[384,128], index: 3, kind: input, shape index: {}]
  %s4 = inlined_call_operand.vmem [shape: f32[1,128], index: 4, kind: input, shape index: {}]
  %s5 = inlined_call_operand.hbm [shape: f32[2,16,128], index: 5, kind: output, shape index: {}]
  %s6 = sld [smem:[#allocation0]]
  $region65: #{tpu_custom_call.1} parent=0
    _
  %s8 = ssub.s32 1, %s6
  %s9 = scalar_select 0, %s8, %s6
  $region1: #{tpu_custom_call.1} parent=0
    #allocation2 [shape = 'u8[16384]{0}', space=vmem, size = 0x4000, scoped, tag = 'input window, operand 0']
    #allocation3 [shape = 's32[2]{0}', space=sflag, size = 0x8, scoped, tag = 'scoped memory for tpu_custom_call.1']
    #allocation4 [shape = 's32[2]{0}', space=sflag, size = 0x8, scoped, tag = 'scoped memory for tpu_custom_call.1']
    #allocation5 [shape = 'u8[196608]{0}', space=vmem, size = 0x30000, scoped, tag = 'input window, operand 1, single buffered']
    #allocation6 [shape = 's32[1]{0}', space=sflag, size = 0x4, scoped, tag = 'scoped memory for tpu_custom_call.1']
    #allocation7 [shape = 'u8[196608]{0}', space=vmem, size = 0x30000, scoped, tag = 'input window, operand 3, single buffered']
    #allocation8 [shape = 'u8[16384]{0}', space=vmem, size = 0x4000, scoped, tag = 'output window, operand 0']
    %10 = vsyncpa [#allocation3], 0
    %s11 = scalar_lea.sflag [#allocation3], 1
    %12 = vsyncpa %s11, 0
    %13 = vsyncpa [#allocation6], 0
    %14 = vsyncpa [#allocation4], 0
    %s15 = scalar_lea.sflag [#allocation4], 1
    %16 = vsyncpa %s15, 0
    loop: start=0, step=1, limit=4
    $region2: #{tpu_custom_call.1} parent=1 // loop_pre_header
      _
    $region3: #{tpu_custom_call.1} parent=1 // loop_header
      %s18 = sphi 0, %s22
      %p19 = scmp.ge.s32.totalorder %s18, 4
      %s28 = sphi 0, %s30
      %s31 = sphi 0, %s28
      %s32 = sphi 0, %s31
      %s48 = sphi 0, %s32
      %s52 = sphi 0, %s52
      %s54 = sphi 0, %s52
      %s55 = sphi 0, %s54
      %s69 = sphi 0, %s55
      %s73 = sphi 0, %s73
      %s75 = sphi 0, %s73
      %s76 = sphi 0, %s75
      %s90 = sphi 0, %s76
      %s94 = sphi 0, %s94
      %s96 = sphi 0, %s94
      %s97 = sphi 0, %s96
      %s111 = sphi 0, %s97
      %s115 = sphi 0, %s115
      %s117 = sphi 0, %s115
      %s118 = sphi 0, %s117
      %s132 = sphi 0, %s118
      %s138 = sphi 0, %s140
      %s141 = sphi 0, %s138
      %s142 = sphi 0, %s141
      %s158 = sphi 0, %s142
    $region4: #{tpu_custom_call.1} parent=1 // loop_header_branch
      %21 = sbr.rel (%p19) target = $region8
    $region5: #{tpu_custom_call.1} parent=1 // loop_body
      %s23 = ssub.s32 %s18, 1
      %s24 = ssub.s32 %s18, 2
      %s25 = sadd.s32 %s18, 1
      %s26 = ssub.s32 %s18, %s25
      %p27 = scmp.eq.s32.totalorder %s26, 0
      %s29 = sadd.s32 %s28, 1
      %s30 = scalar_select %p27, %s28, %s29
      %p33 = pneg %p27
      %p34 = scmp.eq.s32.totalorder %s18, 1
      %p35 = por %p33, %p34
      %p36 = scmp.ne.s32.totalorder %s28, %s31
      %p37 = scmp.eq.s32.totalorder %s18, 0
      %p38 = por %p36, %p37
      %p39 = scmp.ne.s32.totalorder %s28, %s31
      %p40 = scmp.eq.s32.totalorder %s23, 1
      %p41 = por %p39, %p40
      %p42 = scmp.ne.s32.totalorder %s31, %s32
      %p43 = scmp.eq.s32.totalorder %s23, 0
      %p44 = por %p42, %p43
      %p45 = scmp.ne.s32.totalorder %s31, %s32
      %p46 = scmp.eq.s32.totalorder %s24, 1
      %p47 = por %p45, %p46
      %p49 = scmp.ne.s32.totalorder %s32, %s48
      %p50 = scmp.eq.s32.totalorder %s24, 0
      %p51 = por %p49, %p50
      %s53 = sadd.s32 %s52, 1
      %p56 = scmp.eq.s32.totalorder %s18, 1
      %p57 = scmp.ne.s32.totalorder %s52, %s54
      %p58 = scmp.eq.s32.totalorder %s18, 0
      %p59 = por %p57, %p58
      %p60 = scmp.ne.s32.totalorder %s52, %s54
      %p61 = scmp.eq.s32.totalorder %s23, 1
      %p62 = por %p60, %p61
      %p63 = scmp.ne.s32.totalorder %s54, %s55
      %p64 = scmp.eq.s32.totalorder %s23, 0
      %p65 = por %p63, %p64
      %p66 = scmp.ne.s32.totalorder %s54, %s55
      %p67 = scmp.eq.s32.totalorder %s24, 1
      %p68 = por %p66, %p67
      %p70 = scmp.ne.s32.totalorder %s55, %s69
      %p71 = scmp.eq.s32.totalorder %s24, 0
      %p72 = por %p70, %p71
      %s74 = sadd.s32 %s73, 1
      %p77 = scmp.eq.s32.totalorder %s18, 1
      %p78 = scmp.ne.s32.totalorder %s73, %s75
      %p79 = scmp.eq.s32.totalorder %s18, 0
      %p80 = por %p78, %p79
      %p81 = scmp.ne.s32.totalorder %s73, %s75
      %p82 = scmp.eq.s32.totalorder %s23, 1
      %p83 = por %p81, %p82
      %p84 = scmp.ne.s32.totalorder %s75, %s76
      %p85 = scmp.eq.s32.totalorder %s23, 0
      %p86 = por %p84, %p85
      %p87 = scmp.ne.s32.totalorder %s75, %s76
      %p88 = scmp.eq.s32.totalorder %s24, 1
      %p89 = por %p87, %p88
      %p91 = scmp.ne.s32.totalorder %s76, %s90
      %p92 = scmp.eq.s32.totalorder %s24, 0
      %p93 = por %p91, %p92
      %s95 = sadd.s32 %s94, 1
      %p98 = scmp.eq.s32.totalorder %s18, 1
      %p99 = scmp.ne.s32.totalorder %s94, %s96
      %p100 = scmp.eq.s32.totalorder %s18, 0
      %p101 = por %p99, %p100
      %p102 = scmp.ne.s32.totalorder %s94, %s96
      %p103 = scmp.eq.s32.totalorder %s23, 1
      %p104 = por %p102, %p103
      %p105 = scmp.ne.s32.totalorder %s96, %s97
      %p106 = scmp.eq.s32.totalorder %s23, 0
      %p107 = por %p105, %p106
      %p108 = scmp.ne.s32.totalorder %s96, %s97
      %p109 = scmp.eq.s32.totalorder %s24, 1
      %p110 = por %p108, %p109
      %p112 = scmp.ne.s32.totalorder %s97, %s111
      %p113 = scmp.eq.s32.totalorder %s24, 0
      %p114 = por %p112, %p113
      %s116 = sadd.s32 %s115, 1
      %p119 = scmp.eq.s32.totalorder %s18, 1
      %p120 = scmp.ne.s32.totalorder %s115, %s117
      %p121 = scmp.eq.s32.totalorder %s18, 0
      %p122 = por %p120, %p121
      %p123 = scmp.ne.s32.totalorder %s115, %s117
      %p124 = scmp.eq.s32.totalorder %s23, 1
      %p125 = por %p123, %p124
      %p126 = scmp.ne.s32.totalorder %s117, %s118
      %p127 = scmp.eq.s32.totalorder %s23, 0
      %p128 = por %p126, %p127
      %p129 = scmp.ne.s32.totalorder %s117, %s118
      %p130 = scmp.eq.s32.totalorder %s24, 1
      %p131 = por %p129, %p130
      %p133 = scmp.ne.s32.totalorder %s118, %s132
      %p134 = scmp.eq.s32.totalorder %s24, 0
      %p135 = por %p133, %p134
      %s136 = ssub.s32 %s18, %s25
      %p137 = scmp.eq.s32.totalorder %s136, 0
      %s139 = sadd.s32 %s138, 1
      %s140 = scalar_select %p137, %s138, %s139
      %p143 = pneg %p137
      %p144 = scmp.eq.s32.totalorder %s18, 1
      %p145 = por %p143, %p144
      %p146 = scmp.ne.s32.totalorder %s138, %s141
      %p147 = scmp.eq.s32.totalorder %s18, 0
      %p148 = por %p146, %p147
      %p149 = scmp.ne.s32.totalorder %s138, %s141
      %p150 = scmp.eq.s32.totalorder %s23, 1
      %p151 = por %p149, %p150
      %p152 = scmp.ne.s32.totalorder %s141, %s142
      %p153 = scmp.eq.s32.totalorder %s23, 0
      %p154 = por %p152, %p153
      %p155 = scmp.ne.s32.totalorder %s141, %s142
      %p156 = scmp.eq.s32.totalorder %s24, 1
      %p157 = por %p155, %p156
      %p159 = scmp.ne.s32.totalorder %s142, %s158
      %p160 = scmp.eq.s32.totalorder %s24, 0
      %p161 = por %p159, %p160
      %p162 = scmp.le.s32.totalorder 1, %s18
      %p163 = scmp.lt.s32.totalorder %s18, 3
      %p164 = pnand %p162, %p163
      %p165 = pneg %p164
      // Predicated region
      $region9: #{tpu_custom_call.1} parent=5 // pred_check
        _
      $region10: #{tpu_custom_call.1} parent=5 // pred_check_branch
        %167 = sbr.rel (%p164) target = $region12
      $region11: #{tpu_custom_call.1} parent=5 // pred_region
        %s168 = ssub.s32 %s18, 1
        // Predicated region
        $region13: #{tpu_custom_call.1} parent=11 // pred_check
          %p169 = pneg %p65
        $region14: #{tpu_custom_call.1} parent=11 // pred_check_branch
          %171 = sbr.rel (%p169) target = $region16
        $region15: #{tpu_custom_call.1} parent=11 // pred_region
          %s173 = ssub.s32 6144, 6144
          %174 = vsyncadd [#allocation6], %s173
          %s175 = sshll.u32 [#allocation5], 4
          %s176 = int_to_ptr.vmem [resolvable:$true] %s175
          %181 = dma.hbm_to_vmem [thread:$0]  %s1, 6144, %s176, [#allocation6], 128, 128, 8
        $region16: #{tpu_custom_call.1} parent=11 // pred_fallthru
          _
        // Predicated region
        $region17: #{tpu_custom_call.1} parent=11 // pred_check
          %p182 = pneg %p86
        $region18: #{tpu_custom_call.1} parent=11 // pred_check_branch
          %184 = sbr.rel (%p182) target = $region20
        $region19: #{tpu_custom_call.1} parent=11 // pred_region
          _
        $region20: #{tpu_custom_call.1} parent=11 // pred_fallthru
          _
        // Predicated region
        $region21: #{tpu_custom_call.1} parent=11 // pred_check
          %p185 = pneg %p107
        $region22: #{tpu_custom_call.1} parent=11 // pred_check_branch
          %187 = sbr.rel (%p185) target = $region24
        $region23: #{tpu_custom_call.1} parent=11 // pred_region
          %s189 = ssub.s32 6144, 6144
          %190 = vsyncadd [#allocation6], %s189
          %s191 = sshll.u32 [#allocation7], 4
          %s192 = int_to_ptr.vmem [resolvable:$true] %s191
          %197 = dma.hbm_to_vmem [thread:$0]  %s3, 6144, %s192, [#allocation6], 128, 128, 8
        $region24: #{tpu_custom_call.1} parent=11 // pred_fallthru
          _
        // Predicated region
        $region25: #{tpu_custom_call.1} parent=11 // pred_check
          %p198 = pneg %p128
        $region26: #{tpu_custom_call.1} parent=11 // pred_check_branch
          %200 = sbr.rel (%p198) target = $region28
        $region27: #{tpu_custom_call.1} parent=11 // pred_region
          _
        $region28: #{tpu_custom_call.1} parent=11 // pred_fallthru
          _
      $region12: #{tpu_custom_call.1} parent=5 // pred_fallthru
        _
      %p201 = scmp.lt.s32.totalorder %s18, 2
      // Predicated region
      $region29: #{tpu_custom_call.1} parent=5 // pred_check
        %p202 = pneg %p201
      $region30: #{tpu_custom_call.1} parent=5 // pred_check_branch
        %204 = sbr.rel (%p202) target = $region32
      $region31: #{tpu_custom_call.1} parent=5 // pred_region
        // Predicated region
        $region33: #{tpu_custom_call.1} parent=31 // pred_check
          %p205 = pneg %p38
        $region34: #{tpu_custom_call.1} parent=31 // pred_check_branch
          %207 = sbr.rel (%p205) target = $region36
        $region35: #{tpu_custom_call.1} parent=31 // pred_region
          %s208 = sand.u32 %s28, 1
          %s209 = scalar_lea.sflag [#allocation3], %s208
          %s210 = sand.u32 %s28, 1
          %s211 = smul.addr %s210, 16
          %s212 = scalar_lea.vmem [#allocation2], %s211
          %s214 = ssub.s32 256, 256
          %215 = vsyncadd %s209, %s214
          %s216 = smul.addr %s18, 2
          %s217 = smul.addr %s216, 128
          %s218 = scalar_lea.hbm %s0, %s217
          %s219 = sshll.u32 %s212, 4
          %s220 = int_to_ptr.vmem [resolvable:$true] %s219
          %225 = dma.hbm_to_vmem [thread:$0]  %s218, 256, %s220, %s209, 128, 128, 8
        $region36: #{tpu_custom_call.1} parent=31 // pred_fallthru
          _
      $region32: #{tpu_custom_call.1} parent=5 // pred_fallthru
        _
      %p226 = scmp.le.s32.totalorder 1, %s18
      %p227 = scmp.lt.s32.totalorder %s18, 3
      %p228 = pnand %p226, %p227
      %p229 = pneg %p228
      // Predicated region
      $region37: #{tpu_custom_call.1} parent=5 // pred_check
        _
      $region38: #{tpu_custom_call.1} parent=5 // pred_check_branch
        %231 = sbr.rel (%p228) target = $region40
      $region39: #{tpu_custom_call.1} parent=5 // pred_region
        %s232 = ssub.s32 %s18, 1
        %s233 = sand.u32 %s31, 1
        %s234 = scalar_lea.sflag [#allocation3], %s233
        %s235 = sand.u32 %s31, 1
        %s236 = smul.addr %s235, 16
        %s237 = scalar_lea.vmem [#allocation2], %s236
        // Predicated region
        $region41: #{tpu_custom_call.1} parent=39 // pred_check
          %p238 = pneg %p44
        $region42: #{tpu_custom_call.1} parent=39 // pred_check_branch
          %240 = sbr.rel (%p238) target = $region44
        $region43: #{tpu_custom_call.1} parent=39 // pred_region
          %241 = dma.done %s234, 256
        $region44: #{tpu_custom_call.1} parent=39 // pred_fallthru
          _
        // Predicated region
        $region45: #{tpu_custom_call.1} parent=39 // pred_check
          %p242 = pneg %p65
        $region46: #{tpu_custom_call.1} parent=39 // pred_check_branch
          %244 = sbr.rel (%p242) target = $region48
        $region47: #{tpu_custom_call.1} parent=39 // pred_region
          %245 = dma.done [#allocation6], 6144
        $region48: #{tpu_custom_call.1} parent=39 // pred_fallthru
          _
        // Predicated region
        $region49: #{tpu_custom_call.1} parent=39 // pred_check
          %p246 = pneg %p107
        $region50: #{tpu_custom_call.1} parent=39 // pred_check_branch
          %248 = sbr.rel (%p246) target = $region52
        $region51: #{tpu_custom_call.1} parent=39 // pred_region
          %249 = dma.done [#allocation6], 6144
        $region52: #{tpu_custom_call.1} parent=39 // pred_fallthru
          _
        %s250 = sand.u32 %s31, 1
        %s251 = scalar_lea.sflag [#allocation3], %s250
        %s252 = sand.u32 %s31, 1
        %s253 = smul.addr %s252, 16
        %s254 = scalar_lea.vmem [#allocation2], %s253
        %p255 = pneg %p44
        %p256 = pneg %p41
        %p257 = pneg %p65
        %p258 = pneg %p62
        %p259 = pneg %p86
        %p260 = pneg %p83
        %p261 = pneg %p107
        %p262 = pneg %p104
        %p263 = pneg %p128
        %p264 = pneg %p125
        %p265 = pneg %p154
        %p266 = pneg %p151
        %s267 = sand.u32 %s141, 1
        %s268 = scalar_lea.sflag [#allocation4], %s267
        %s269 = sand.u32 %s141, 1
        %s270 = smul.addr %s269, 16
        %s271 = scalar_lea.vmem [#allocation8], %s270
        %v272 = vld [vmem:[%s237] sm:$0xff]
        %v273 = vld [vmem:[%s237 + $0x8] sm:$0xff]
        %v274 = vlaneseq
        %v275 = vshrl.u32 %v274, 7
        %v276 = vadd.s32 %v275, 8
        %v277 = vrot.slane %v272, 7
        %v278 = vrot.slane %v273, 7
        %vm279 = vcmp.lt.s32.totalorder %v275, 1
        %v280 = vsel %vm279, %v277, %v278
        %v281 = vsel %vm279, %v278, %v277
        %vm282 = vcmp.eq.s32.totalorder %v275, 0
        %vm283 = vcmp.eq.s32.totalorder %v276, 0
        %v284 = vsel %vm282, 0.0, %v281
        %v285 = vsel %vm283, 0.0, %v280
        %v286 = vrot.slane %v272, 1
        %v287 = vrot.slane %v273, 1
        %vm288 = vcmp.lt.s32.totalorder %v275, 7
        %v289 = vsel %vm288, %v286, %v287
        %v290 = vsel %vm288, %v287, %v286
        %vm291 = vcmp.eq.s32.totalorder %v275, 15
        %vm292 = vcmp.eq.s32.totalorder %v276, 15
        %v293 = vsel %vm291, 0.0, %v289
        %v294 = vsel %vm292, 0.0, %v290
        %v295 = vld [vmem:[#allocation5] sm:$0xff]
        %v296 = vld [vmem:[#allocation5 + $0x8] sm:$0xff]
        %v297 = vld [vmem:[#allocation5 + $0x10] sm:$0xff]
        %v298 = vld [vmem:[#allocation5 + $0x18] sm:$0xff]
        %v299 = vld [vmem:[#allocation5 + $0x20] sm:$0xff]
        %v300 = vld [vmem:[#allocation5 + $0x28] sm:$0xff]
        %v301 = vld [vmem:[#allocation5 + $0x30] sm:$0xff]
        %v302 = vld [vmem:[#allocation5 + $0x38] sm:$0xff]
        %v303 = vld [vmem:[#allocation5 + $0x40] sm:$0xff]
        %v304 = vld [vmem:[#allocation5 + $0x48] sm:$0xff]
        %v305 = vld [vmem:[#allocation5 + $0x50] sm:$0xff]
        %v306 = vld [vmem:[#allocation5 + $0x58] sm:$0xff]
        %v307 = vld [vmem:[#allocation5 + $0x60] sm:$0xff]
        %v308 = vld [vmem:[#allocation5 + $0x68] sm:$0xff]
        %v309 = vld [vmem:[#allocation5 + $0x70] sm:$0xff]
        %v310 = vld [vmem:[#allocation5 + $0x78] sm:$0xff]
        %v311 = vld [vmem:[#allocation5 + $0x80] sm:$0xff]
        %v312 = vld [vmem:[#allocation5 + $0x88] sm:$0xff]
        %v313 = vld [vmem:[#allocation5 + $0x90] sm:$0xff]
        %v314 = vld [vmem:[#allocation5 + $0x98] sm:$0xff]
        %v315 = vld [vmem:[#allocation5 + $0xa0] sm:$0xff]
        %v316 = vld [vmem:[#allocation5 + $0xa8] sm:$0xff]
        %v317 = vld [vmem:[#allocation5 + $0xb0] sm:$0xff]
        %v318 = vld [vmem:[#allocation5 + $0xb8] sm:$0xff]
        %v319 = vld [vmem:[#allocation5 + $0xc0] sm:$0xff]
        %v320 = vld [vmem:[#allocation5 + $0xc8] sm:$0xff]
        %v321 = vld [vmem:[#allocation5 + $0xd0] sm:$0xff]
        %v322 = vld [vmem:[#allocation5 + $0xd8] sm:$0xff]
        %v323 = vld [vmem:[#allocation5 + $0xe0] sm:$0xff]
        %v324 = vld [vmem:[#allocation5 + $0xe8] sm:$0xff]
        %v325 = vld [vmem:[#allocation5 + $0xf0] sm:$0xff]
        %v326 = vld [vmem:[#allocation5 + $0xf8] sm:$0xff]
        %v327 = vld [vmem:[#allocation5 + $0x100] sm:$0xff]
        %v328 = vld [vmem:[#allocation5 + $0x108] sm:$0xff]
        %v329 = vld [vmem:[#allocation5 + $0x110] sm:$0xff]
        %v330 = vld [vmem:[#allocation5 + $0x118] sm:$0xff]
        %v331 = vld [vmem:[#allocation5 + $0x120] sm:$0xff]
        %v332 = vld [vmem:[#allocation5 + $0x128] sm:$0xff]
        %v333 = vld [vmem:[#allocation5 + $0x130] sm:$0xff]
        %v334 = vld [vmem:[#allocation5 + $0x138] sm:$0xff]
        %v335 = vld [vmem:[#allocation5 + $0x140] sm:$0xff]
        %v336 = vld [vmem:[#allocation5 + $0x148] sm:$0xff]
        %v337 = vld [vmem:[#allocation5 + $0x150] sm:$0xff]
        %v338 = vld [vmem:[#allocation5 + $0x158] sm:$0xff]
        %v339 = vld [vmem:[#allocation5 + $0x160] sm:$0xff]
        %v340 = vld [vmem:[#allocation5 + $0x168] sm:$0xff]
        %v341 = vld [vmem:[#allocation5 + $0x170] sm:$0xff]
        %v342 = vld [vmem:[#allocation5 + $0x178] sm:$0xff]
        %v343 = vld [vmem:[%s2] sm:$0x1]
        %v345 = vlaneseq
        %v346 = vshrl.u32 %v345, 7
        %v347 = vsub.s32 0, %v346
        %v348 = vrot.slane %v343, %v347
        %350 = vmatprep.subr.mxu0 0.0
        %351 = vmatpush1.msra.mxu0 %v295
        %352 = vmatprep.subr.mxu0 0.0
        %353 = vmatpush1.msra.mxu0 %v296
        %354 = vmatprep.subr.mxu0 0.0
        %355 = vmatpush1.msra.mxu0 %v297
        %356 = vmatprep.subr.mxu0 0.0
        %357 = vmatpush1.msra.mxu0 %v298
        %358 = vmatprep.subr.mxu0 0.0
        %359 = vmatpush1.msra.mxu0 %v299
        %360 = vmatprep.subr.mxu0 0.0
        %361 = vmatpush1.msra.mxu0 %v300
        %362 = vmatprep.subr.mxu0 0.0
        %363 = vmatpush1.msra.mxu0 %v301
        %364 = vmatprep.subr.mxu0 0.0
        %365 = vmatpush1.msra.mxu0 %v302
        %366 = vmatprep.subr.mxu0 0.0
        %367 = vmatpush1.msra.mxu0 %v303
        %368 = vmatprep.subr.mxu0 0.0
        %369 = vmatpush1.msra.mxu0 %v304
        %370 = vmatprep.subr.mxu0 0.0
        %371 = vmatpush1.msra.mxu0 %v305
        %372 = vmatprep.subr.mxu0 0.0
        %373 = vmatpush1.msra.mxu0 %v306
        %374 = vmatprep.subr.mxu0 0.0
        %375 = vmatpush1.msra.mxu0 %v307
        %376 = vmatprep.subr.mxu0 0.0
        %377 = vmatpush1.msra.mxu0 %v308
        %378 = vmatprep.subr.mxu0 0.0
        %379 = vmatpush1.msra.mxu0 %v309
        %380 = vmatprep.subr.mxu0 0.0
        %381 = vmatpush1.msra.mxu0 %v310
        %382 = vmatprep.subr.mxu0 0.0
        %383 = vmatpush1.msra.mxu0 %v311
        %384 = vmatprep.subr.mxu0 0.0
        %385 = vmatpush1.msra.mxu0 %v312
        %386 = vmatprep.subr.mxu0 0.0
        %387 = vmatpush1.msra.mxu0 %v313
        %388 = vmatprep.subr.mxu0 0.0
        %389 = vmatpush1.msra.mxu0 %v314
        %390 = vmatprep.subr.mxu0 0.0
        %391 = vmatpush1.msra.mxu0 %v315
        %392 = vmatprep.subr.mxu0 0.0
        %393 = vmatpush1.msra.mxu0 %v316
        %394 = vmatprep.subr.mxu0 0.0
        %395 = vmatpush1.msra.mxu0 %v317
        %396 = vmatprep.subr.mxu0 0.0
        %397 = vmatpush1.msra.mxu0 %v318
        %398 = vmatprep.subr.mxu0 0.0
        %399 = vmatpush1.msra.mxu0 %v319
        %400 = vmatprep.subr.mxu0 0.0
        %401 = vmatpush1.msra.mxu0 %v320
        %402 = vmatprep.subr.mxu0 0.0
        %403 = vmatpush1.msra.mxu0 %v321
        %404 = vmatprep.subr.mxu0 0.0
        %405 = vmatpush1.msra.mxu0 %v322
        %406 = vmatprep.subr.mxu0 0.0
        %407 = vmatpush1.msra.mxu0 %v323
        %408 = vmatprep.subr.mxu0 0.0
        %409 = vmatpush1.msra.mxu0 %v324
        %410 = vmatprep.subr.mxu0 0.0
        %411 = vmatpush1.msra.mxu0 %v325
        %412 = vmatprep.subr.mxu0 0.0
        %413 = vmatpush1.msra.mxu0 %v326
        %414 = vmatprep.mubr.f32.mxu0 %v272
        %415 = vmatmul.mubr.f32.gmra.mrb[0].mxu0 %v284
        %v416 = vpop.f32.mrb[0].mxu0
        %v417 = vadd.f32 %v348, %v416
        %v418 = vpop.f32.mrb[0].mxu0
        %419 = vmatprep.mubr.f32.mxu0 %v273
        %420 = vmatmul.mubr.f32.gmra.mrb[0].mxu0 %v285
        %v421 = vpop.f32.mrb[0].mxu0
        %v422 = vadd.f32 %v348, %v421
        %v423 = vpop.f32.mrb[0].mxu0
        %424 = vdwg.mxu0
        %425 = vmatprep.subr.mxu0 0.0
        %426 = vmatpush1.msra.mxu0 %v327
        %427 = vmatprep.subr.mxu0 0.0
        %428 = vmatpush1.msra.mxu0 %v328
        %429 = vmatprep.subr.mxu0 0.0
        %430 = vmatpush1.msra.mxu0 %v329
        %431 = vmatprep.subr.mxu0 0.0
        %432 = vmatpush1.msra.mxu0 %v330
        %433 = vmatprep.subr.mxu0 0.0
        %434 = vmatpush1.msra.mxu0 %v331
        %435 = vmatprep.subr.mxu0 0.0
        %436 = vmatpush1.msra.mxu0 %v332
        %437 = vmatprep.subr.mxu0 0.0
        %438 = vmatpush1.msra.mxu0 %v333
        %439 = vmatprep.subr.mxu0 0.0
        %440 = vmatpush1.msra.mxu0 %v334
        %441 = vmatprep.subr.mxu0 0.0
        %442 = vmatpush1.msra.mxu0 %v335
        %443 = vmatprep.subr.mxu0 0.0
        %444 = vmatpush1.msra.mxu0 %v336
        %445 = vmatprep.subr.mxu0 0.0
        %446 = vmatpush1.msra.mxu0 %v337
        %447 = vmatprep.subr.mxu0 0.0
        %448 = vmatpush1.msra.mxu0 %v338
        %449 = vmatprep.subr.mxu0 0.0
        %450 = vmatpush1.msra.mxu0 %v339
        %451 = vmatprep.subr.mxu0 0.0
        %452 = vmatpush1.msra.mxu0 %v340
        %453 = vmatprep.subr.mxu0 0.0
        %454 = vmatpush1.msra.mxu0 %v341
        %455 = vmatprep.subr.mxu0 0.0
        %456 = vmatpush1.msra.mxu0 %v342
        %457 = vmatprep.subr.mxu0 0.0
        %458 = vmatpush1.msra.mxu0 0.0
        %459 = vmatprep.subr.mxu0 0.0
        %460 = vmatpush1.msra.mxu0 0.0
        %461 = vmatprep.subr.mxu0 0.0
        %462 = vmatpush1.msra.mxu0 0.0
        %463 = vmatprep.subr.mxu0 0.0
        %464 = vmatpush1.msra.mxu0 0.0
        %465 = vmatprep.subr.mxu0 0.0
        %466 = vmatpush1.msra.mxu0 0.0
        %467 = vmatprep.subr.mxu0 0.0
        %468 = vmatpush1.msra.mxu0 0.0
        %469 = vmatprep.subr.mxu0 0.0
        %470 = vmatpush1.msra.mxu0 0.0
        %471 = vmatprep.subr.mxu0 0.0
        %472 = vmatpush1.msra.mxu0 0.0
        %473 = vmatprep.subr.mxu0 0.0
        %474 = vmatpush1.msra.mxu0 0.0
        %475 = vmatprep.subr.mxu0 0.0
        %476 = vmatpush1.msra.mxu0 0.0
        %477 = vmatprep.subr.mxu0 0.0
        %478 = vmatpush1.msra.mxu0 0.0
        %479 = vmatprep.subr.mxu0 0.0
        %480 = vmatpush1.msra.mxu0 0.0
        %481 = vmatprep.subr.mxu0 0.0
        %482 = vmatpush1.msra.mxu0 0.0
        %483 = vmatprep.subr.mxu0 0.0
        %484 = vmatpush1.msra.mxu0 0.0
        %485 = vmatprep.subr.mxu0 0.0
        %486 = vmatpush1.msra.mxu0 0.0
        %487 = vmatprep.subr.mxu0 0.0
        %488 = vmatpush1.msra.mxu0 0.0
        %489 = vmatprep.mubr.f32.mxu0 0.0
        %490 = vmatmul.mubr.f32.gmra.mrb[0].mxu0 %v293
        %v491 = vpop.f32.mrb[0].mxu0
        %v492 = vadd.f32 %v417, %v491
        %v493 = vpop.f32.mrb[0].mxu0
        %494 = vmatprep.mubr.f32.mxu0 0.0
        %495 = vmatmul.mubr.f32.gmra.mrb[0].mxu0 %v294
        %v496 = vpop.f32.mrb[0].mxu0
        %v497 = vadd.f32 %v422, %v496
        %v498 = vpop.f32.mrb[0].mxu0
        %499 = vdwg.mxu0
        %v500 = vmax.f32 %v492, 0.0
        %v501 = vmax.f32 %v497, 0.0
        %v502 = vrot.slane %v500, 7
        %v503 = vrot.slane %v501, 7
        %v504 = vsel %vm279, %v502, %v503
        %v505 = vsel %vm279, %v503, %v502
        %v506 = vsel %vm282, 0.0, %v505
        %v507 = vsel %vm283, 0.0, %v504
        %v508 = vrot.slane %v500, 1
        %v509 = vrot.slane %v501, 1
        %v510 = vsel %vm288, %v508, %v509
        %v511 = vsel %vm288, %v509, %v508
        %v512 = vsel %vm291, 0.0, %v510
        %v513 = vsel %vm292, 0.0, %v511
        %v514 = vld [vmem:[#allocation7] sm:$0xff]
        %v515 = vld [vmem:[#allocation7 + $0x8] sm:$0xff]
        %v516 = vld [vmem:[#allocation7 + $0x10] sm:$0xff]
        %v517 = vld [vmem:[#allocation7 + $0x18] sm:$0xff]
        %v518 = vld [vmem:[#allocation7 + $0x20] sm:$0xff]
        %v519 = vld [vmem:[#allocation7 + $0x28] sm:$0xff]
        %v520 = vld [vmem:[#allocation7 + $0x30] sm:$0xff]
        %v521 = vld [vmem:[#allocation7 + $0x38] sm:$0xff]
        %v522 = vld [vmem:[#allocation7 + $0x40] sm:$0xff]
        %v523 = vld [vmem:[#allocation7 + $0x48] sm:$0xff]
        %v524 = vld [vmem:[#allocation7 + $0x50] sm:$0xff]
        %v525 = vld [vmem:[#allocation7 + $0x58] sm:$0xff]
        %v526 = vld [vmem:[#allocation7 + $0x60] sm:$0xff]
        %v527 = vld [vmem:[#allocation7 + $0x68] sm:$0xff]
        %v528 = vld [vmem:[#allocation7 + $0x70] sm:$0xff]
        %v529 = vld [vmem:[#allocation7 + $0x78] sm:$0xff]
        %v530 = vld [vmem:[#allocation7 + $0x80] sm:$0xff]
        %v531 = vld [vmem:[#allocation7 + $0x88] sm:$0xff]
        %v532 = vld [vmem:[#allocation7 + $0x90] sm:$0xff]
        %v533 = vld [vmem:[#allocation7 + $0x98] sm:$0xff]
        %v534 = vld [vmem:[#allocation7 + $0xa0] sm:$0xff]
        %v535 = vld [vmem:[#allocation7 + $0xa8] sm:$0xff]
        %v536 = vld [vmem:[#allocation7 + $0xb0] sm:$0xff]
        %v537 = vld [vmem:[#allocation7 + $0xb8] sm:$0xff]
        %v538 = vld [vmem:[#allocation7 + $0xc0] sm:$0xff]
        %v539 = vld [vmem:[#allocation7 + $0xc8] sm:$0xff]
        %v540 = vld [vmem:[#allocation7 + $0xd0] sm:$0xff]
        %v541 = vld [vmem:[#allocation7 + $0xd8] sm:$0xff]
        %v542 = vld [vmem:[#allocation7 + $0xe0] sm:$0xff]
        %v543 = vld [vmem:[#allocation7 + $0xe8] sm:$0xff]
        %v544 = vld [vmem:[#allocation7 + $0xf0] sm:$0xff]
        %v545 = vld [vmem:[#allocation7 + $0xf8] sm:$0xff]
        %v546 = vld [vmem:[#allocation7 + $0x100] sm:$0xff]
        %v547 = vld [vmem:[#allocation7 + $0x108] sm:$0xff]
        %v548 = vld [vmem:[#allocation7 + $0x110] sm:$0xff]
        %v549 = vld [vmem:[#allocation7 + $0x118] sm:$0xff]
        %v550 = vld [vmem:[#allocation7 + $0x120] sm:$0xff]
        %v551 = vld [vmem:[#allocation7 + $0x128] sm:$0xff]
        %v552 = vld [vmem:[#allocation7 + $0x130] sm:$0xff]
        %v553 = vld [vmem:[#allocation7 + $0x138] sm:$0xff]
        %v554 = vld [vmem:[#allocation7 + $0x140] sm:$0xff]
        %v555 = vld [vmem:[#allocation7 + $0x148] sm:$0xff]
        %v556 = vld [vmem:[#allocation7 + $0x150] sm:$0xff]
        %v557 = vld [vmem:[#allocation7 + $0x158] sm:$0xff]
        %v558 = vld [vmem:[#allocation7 + $0x160] sm:$0xff]
        %v559 = vld [vmem:[#allocation7 + $0x168] sm:$0xff]
        %v560 = vld [vmem:[#allocation7 + $0x170] sm:$0xff]
        %v561 = vld [vmem:[#allocation7 + $0x178] sm:$0xff]
        %v562 = vld [vmem:[%s4] sm:$0x1]
        %v564 = vlaneseq
        %v565 = vshrl.u32 %v564, 7
        %v566 = vsub.s32 0, %v565
        %v567 = vrot.slane %v562, %v566
        %569 = vmatprep.subr.mxu0 0.0
        %570 = vmatpush1.msra.mxu0 %v514
        %571 = vmatprep.subr.mxu0 0.0
        %572 = vmatpush1.msra.mxu0 %v515
        %573 = vmatprep.subr.mxu0 0.0
        %574 = vmatpush1.msra.mxu0 %v516
        %575 = vmatprep.subr.mxu0 0.0
        %576 = vmatpush1.msra.mxu0 %v517
        %577 = vmatprep.subr.mxu0 0.0
        %578 = vmatpush1.msra.mxu0 %v518
        %579 = vmatprep.subr.mxu0 0.0
        %580 = vmatpush1.msra.mxu0 %v519
        %581 = vmatprep.subr.mxu0 0.0
        %582 = vmatpush1.msra.mxu0 %v520
        %583 = vmatprep.subr.mxu0 0.0
        %584 = vmatpush1.msra.mxu0 %v521
        %585 = vmatprep.subr.mxu0 0.0
        %586 = vmatpush1.msra.mxu0 %v522
        %587 = vmatprep.subr.mxu0 0.0
        %588 = vmatpush1.msra.mxu0 %v523
        %589 = vmatprep.subr.mxu0 0.0
        %590 = vmatpush1.msra.mxu0 %v524
        %591 = vmatprep.subr.mxu0 0.0
        %592 = vmatpush1.msra.mxu0 %v525
        %593 = vmatprep.subr.mxu0 0.0
        %594 = vmatpush1.msra.mxu0 %v526
        %595 = vmatprep.subr.mxu0 0.0
        %596 = vmatpush1.msra.mxu0 %v527
        %597 = vmatprep.subr.mxu0 0.0
        %598 = vmatpush1.msra.mxu0 %v528
        %599 = vmatprep.subr.mxu0 0.0
        %600 = vmatpush1.msra.mxu0 %v529
        %601 = vmatprep.subr.mxu0 0.0
        %602 = vmatpush1.msra.mxu0 %v530
        %603 = vmatprep.subr.mxu0 0.0
        %604 = vmatpush1.msra.mxu0 %v531
        %605 = vmatprep.subr.mxu0 0.0
        %606 = vmatpush1.msra.mxu0 %v532
        %607 = vmatprep.subr.mxu0 0.0
        %608 = vmatpush1.msra.mxu0 %v533
        %609 = vmatprep.subr.mxu0 0.0
        %610 = vmatpush1.msra.mxu0 %v534
        %611 = vmatprep.subr.mxu0 0.0
        %612 = vmatpush1.msra.mxu0 %v535
        %613 = vmatprep.subr.mxu0 0.0
        %614 = vmatpush1.msra.mxu0 %v536
        %615 = vmatprep.subr.mxu0 0.0
        %616 = vmatpush1.msra.mxu0 %v537
        %617 = vmatprep.subr.mxu0 0.0
        %618 = vmatpush1.msra.mxu0 %v538
        %619 = vmatprep.subr.mxu0 0.0
        %620 = vmatpush1.msra.mxu0 %v539
        %621 = vmatprep.subr.mxu0 0.0
        %622 = vmatpush1.msra.mxu0 %v540
        %623 = vmatprep.subr.mxu0 0.0
        %624 = vmatpush1.msra.mxu0 %v541
        %625 = vmatprep.subr.mxu0 0.0
        %626 = vmatpush1.msra.mxu0 %v542
        %627 = vmatprep.subr.mxu0 0.0
        %628 = vmatpush1.msra.mxu0 %v543
        %629 = vmatprep.subr.mxu0 0.0
        %630 = vmatpush1.msra.mxu0 %v544
        %631 = vmatprep.subr.mxu0 0.0
        %632 = vmatpush1.msra.mxu0 %v545
        %633 = vmatprep.mubr.f32.mxu0 %v500
        %634 = vmatmul.mubr.f32.gmra.mrb[0].mxu0 %v506
        %v635 = vpop.f32.mrb[0].mxu0
        %v636 = vadd.f32 %v567, %v635
        %v637 = vpop.f32.mrb[0].mxu0
        %638 = vmatprep.mubr.f32.mxu0 %v501
        %639 = vmatmul.mubr.f32.gmra.mrb[0].mxu0 %v507
        %v640 = vpop.f32.mrb[0].mxu0
        %v641 = vadd.f32 %v567, %v640
        %v642 = vpop.f32.mrb[0].mxu0
        %643 = vdwg.mxu0
        %644 = vmatprep.subr.mxu0 0.0
        %645 = vmatpush1.msra.mxu0 %v546
        %646 = vmatprep.subr.mxu0 0.0
        %647 = vmatpush1.msra.mxu0 %v547
        %648 = vmatprep.subr.mxu0 0.0
        %649 = vmatpush1.msra.mxu0 %v548
        %650 = vmatprep.subr.mxu0 0.0
        %651 = vmatpush1.msra.mxu0 %v549
        %652 = vmatprep.subr.mxu0 0.0
        %653 = vmatpush1.msra.mxu0 %v550
        %654 = vmatprep.subr.mxu0 0.0
        %655 = vmatpush1.msra.mxu0 %v551
        %656 = vmatprep.subr.mxu0 0.0
        %657 = vmatpush1.msra.mxu0 %v552
        %658 = vmatprep.subr.mxu0 0.0
        %659 = vmatpush1.msra.mxu0 %v553
        %660 = vmatprep.subr.mxu0 0.0
        %661 = vmatpush1.msra.mxu0 %v554
        %662 = vmatprep.subr.mxu0 0.0
        %663 = vmatpush1.msra.mxu0 %v555
        %664 = vmatprep.subr.mxu0 0.0
        %665 = vmatpush1.msra.mxu0 %v556
        %666 = vmatprep.subr.mxu0 0.0
        %667 = vmatpush1.msra.mxu0 %v557
        %668 = vmatprep.subr.mxu0 0.0
        %669 = vmatpush1.msra.mxu0 %v558
        %670 = vmatprep.subr.mxu0 0.0
        %671 = vmatpush1.msra.mxu0 %v559
        %672 = vmatprep.subr.mxu0 0.0
        %673 = vmatpush1.msra.mxu0 %v560
        %674 = vmatprep.subr.mxu0 0.0
        %675 = vmatpush1.msra.mxu0 %v561
        %676 = vmatprep.subr.mxu0 0.0
        %677 = vmatpush1.msra.mxu0 0.0
        %678 = vmatprep.subr.mxu0 0.0
        %679 = vmatpush1.msra.mxu0 0.0
        %680 = vmatprep.subr.mxu0 0.0
        %681 = vmatpush1.msra.mxu0 0.0
        %682 = vmatprep.subr.mxu0 0.0
        %683 = vmatpush1.msra.mxu0 0.0
        %684 = vmatprep.subr.mxu0 0.0
        %685 = vmatpush1.msra.mxu0 0.0
        %686 = vmatprep.subr.mxu0 0.0
        %687 = vmatpush1.msra.mxu0 0.0
        %688 = vmatprep.subr.mxu0 0.0
        %689 = vmatpush1.msra.mxu0 0.0
        %690 = vmatprep.subr.mxu0 0.0
        %691 = vmatpush1.msra.mxu0 0.0
        %692 = vmatprep.subr.mxu0 0.0
        %693 = vmatpush1.msra.mxu0 0.0
        %694 = vmatprep.subr.mxu0 0.0
        %695 = vmatpush1.msra.mxu0 0.0
        %696 = vmatprep.subr.mxu0 0.0
        %697 = vmatpush1.msra.mxu0 0.0
        %698 = vmatprep.subr.mxu0 0.0
        %699 = vmatpush1.msra.mxu0 0.0
        %700 = vmatprep.subr.mxu0 0.0
        %701 = vmatpush1.msra.mxu0 0.0
        %702 = vmatprep.subr.mxu0 0.0
        %703 = vmatpush1.msra.mxu0 0.0
        %704 = vmatprep.subr.mxu0 0.0
        %705 = vmatpush1.msra.mxu0 0.0
        %706 = vmatprep.subr.mxu0 0.0
        %707 = vmatpush1.msra.mxu0 0.0
        %708 = vmatprep.mubr.f32.mxu0 0.0
        %709 = vmatmul.mubr.f32.gmra.mrb[0].mxu0 %v512
        %v710 = vpop.f32.mrb[0].mxu0
        %v711 = vadd.f32 %v636, %v710
        %v712 = vpop.f32.mrb[0].mxu0
        %713 = vmatprep.mubr.f32.mxu0 0.0
        %714 = vmatmul.mubr.f32.gmra.mrb[0].mxu0 %v513
        %v715 = vpop.f32.mrb[0].mxu0
        %v716 = vadd.f32 %v641, %v715
        %v717 = vpop.f32.mrb[0].mxu0
        %718 = vdwg.mxu0
        %v719 = vadd.f32 %v711, %v272
        %v720 = vadd.f32 %v716, %v273
        %v721 = vmax.f32 %v719, 0.0
        %v722 = vmax.f32 %v720, 0.0
        %723 = vst [vmem:[%s271] sm:$0xff] %v721
        %724 = vst [vmem:[%s271 + $0x8] sm:$0xff] %v722
        %s725 = sand.u32 %s141, 1
        %s726 = scalar_lea.sflag [#allocation4], %s725
        %s727 = sand.u32 %s141, 1
        %s728 = smul.addr %s727, 16
        %s729 = scalar_lea.vmem [#allocation8], %s728
        // Predicated region
        $region53: #{tpu_custom_call.1} parent=39 // pred_check
          %p730 = pneg %p151
        $region54: #{tpu_custom_call.1} parent=39 // pred_check_branch
          %732 = sbr.rel (%p730) target = $region56
        $region55: #{tpu_custom_call.1} parent=39 // pred_region
          %s734 = ssub.s32 256, 256
          %735 = vsyncadd %s726, %s734
          %s736 = smul.addr %s23, 2
          %s737 = smul.addr %s736, 128
          %s738 = scalar_lea.hbm %s5, %s737
          %s739 = sshll.u32 %s729, 4
          %s740 = int_to_ptr.vmem [resolvable:$true] %s739
          %745 = dma.vmem_to_hbm [thread:$0]  %s740, 256, %s738, %s726, 128, 128, 8
        $region56: #{tpu_custom_call.1} parent=39 // pred_fallthru
          _
      $region40: #{tpu_custom_call.1} parent=5 // pred_fallthru
        _
      %p746 = scmp.le.s32.totalorder 2, %s18
      // Predicated region
      $region57: #{tpu_custom_call.1} parent=5 // pred_check
        %p747 = pneg %p746
      $region58: #{tpu_custom_call.1} parent=5 // pred_check_branch
        %749 = sbr.rel (%p747) target = $region60
      $region59: #{tpu_custom_call.1} parent=5 // pred_region
        %s750 = ssub.s32 %s18, 2
        // Predicated region
        $region61: #{tpu_custom_call.1} parent=59 // pred_check
          %p751 = pneg %p157
        $region62: #{tpu_custom_call.1} parent=59 // pred_check_branch
          %753 = sbr.rel (%p751) target = $region64
        $region63: #{tpu_custom_call.1} parent=59 // pred_region
          %s754 = sand.u32 %s142, 1
          %s755 = scalar_lea.sflag [#allocation4], %s754
          %s756 = sand.u32 %s142, 1
          %s757 = smul.addr %s756, 16
          %s758 = scalar_lea.vmem [#allocation8], %s757
          %759 = dma.done %s755, 256
        $region64: #{tpu_custom_call.1} parent=59 // pred_fallthru
          _
      $region60: #{tpu_custom_call.1} parent=5 // pred_fallthru
        _
    $region6: #{tpu_custom_call.1} parent=1 // loop_footer
      %s22 = sadd.s32 1, %s18
    $region7: #{tpu_custom_call.1} parent=1 // loop_footer_branch
      %17 = sbr.rel target = $region3
    $region8: #{tpu_custom_call.1} parent=1 // loop_exit
      _
    %760 = vsyncpa [#allocation3], 1
    %s761 = scalar_lea.sflag [#allocation3], 1
    %762 = vsyncpa %s761, 1
    %763 = vsyncpa [#allocation6], 1
    %764 = vsyncpa [#allocation4], 1
    %s765 = scalar_lea.sflag [#allocation4], 1
    %766 = vsyncpa %s765, 1

</llo_original>
